<compile_context>
chip_gen: v7x
topology: tpu7x:2x2x1
jax: 0.10.0
libtpu: 0.0.40
codegen_flags: <defaults>
</compile_context>

<pallas_src>
import jax
import jax.numpy as jnp
from jax.experimental import pallas as pl
from jax.experimental.pallas import tpu as pltpu


def _round_up(n, m):
    return ((n + m - 1) // m) * m


def _enc_mlp_pair_kernel(xp_ref,
                         w1_ref, b1_ref,
                         w2_ref, b2_ref,
                         w3_ref, b3_ref,
                         w4_ref, b4_ref,
                         o_ref):
    """4-layer MLP on a paired-row tile.

    xp_ref : (tp, 2F)   two original rows packed side by side on lanes
    wK_ref : block-diagonal weights diag(W, W); w1 is (2F, 2H), rest (2H, 2H)
    bK_ref : (1, 2H)    bias tiled twice
    o_ref  : (tp, 2H)   lane-dense (2H = 128 for the module's H = 64)
    """
    # ---- layer 1 on the VPU: K = 2F is tiny, an MXU pass would be ~wasted.
    x = xp_ref[...]                              # (tp, 2F) f32
    h = b1_ref[...]                              # (1, 2H) -> broadcasts up
    for c in range(x.shape[1]):                  # unrolled at trace time (2F terms)
        h = h + x[:, c:c + 1] * w1_ref[c:c + 1, :]
    h = jnp.maximum(h, 0.0)

    # ---- layers 2..4 on the MXU (128x128 block-diagonal weights).
    h = jnp.dot(h, w2_ref[...], preferred_element_type=jnp.float32) + b2_ref[...]
    h = jnp.maximum(h, 0.0)
    h = jnp.dot(h, w3_ref[...], preferred_element_type=jnp.float32) + b3_ref[...]
    h = jnp.maximum(h, 0.0)
    h = jnp.dot(h, w4_ref[...], preferred_element_type=jnp.float32) + b4_ref[...]

    o_ref[...] = h.astype(o_ref.dtype)           # unmasked 128-lane store


def _block_diag2(w):
    """(K, H) -> (2K, 2H) block-diagonal [[w, 0], [0, w]]."""
    k, h = w.shape
    z = jnp.zeros((k, h), w.dtype)
    top = jnp.concatenate([w, z], axis=1)
    bot = jnp.concatenate([z, w], axis=1)
    return jnp.concatenate([top, bot], axis=0)


def basic_deepset_forward(x, params, *, tm=512, vmem_limit_bytes=None):
    """x: (B, 1, S, F) float32.  Returns enc(x.squeeze(1)) of shape (B, S, H).

    tm = number of original rows (of B*S) processed per grid step; it is
    rounded to a multiple of 16 and clamped for small inputs.  With the
    paired-row layout each grid step works on a (tm//2, 128)-lane tile.
    """
    x = jnp.squeeze(x, axis=1)                    # (B, S, F)
    B, S, F = x.shape
    (w1, b1), (w2, b2), (w3, b3), (w4, b4) = params
    H = w4.shape[1]

    N = B * S
    xf = x.reshape(N, F)

    # Row tile: multiple of 16 so the paired tile (tm//2 rows) is 8-sublane
    # aligned; clamp to the (padded) row count for tiny inputs.
    tm = max(16, (int(tm) // 16) * 16)
    tm = min(tm, _round_up(N, 16))
    N_pad = _round_up(N, tm)

    # Zero-pad ragged row counts; padded rows are computed then sliced off.
    xf_pad = jnp.pad(xf, ((0, N_pad - N), (0, 0)))
    xp = xf_pad.reshape(N_pad // 2, 2 * F)        # two rows side by side (free)

    # Block-diagonal weights / doubled biases (built once, outside the kernel).
    w1b = _block_diag2(w1)                        # (2F, 2H)
    w2b = _block_diag2(w2)                        # (2H, 2H)
    w3b = _block_diag2(w3)
    w4b = _block_diag2(w4)
    b1b = jnp.concatenate([b1, b1], axis=1)       # (1, 2H)
    b2b = jnp.concatenate([b2, b2], axis=1)
    b3b = jnp.concatenate([b3, b3], axis=1)
    b4b = jnp.concatenate([b4, b4], axis=1)

    tp = tm // 2                                  # paired rows per tile
    grid = (N_pad // tm,)
    H2 = 2 * H

    def const_spec(shape):
        # Whole (small) weight/bias resident for every tile.
        return pl.BlockSpec(shape, lambda i: (0, 0))

    out_pairs = pl.pallas_call(
        _enc_mlp_pair_kernel,
        out_shape=jax.ShapeDtypeStruct((N_pad // 2, H2), jnp.float32),
        grid_spec=pltpu.PrefetchScalarGridSpec(
            num_scalar_prefetch=0,
            grid=grid,
            in_specs=[
                pl.BlockSpec((tp, 2 * F), lambda i: (i, 0)),   # paired x tile
                const_spec((2 * F, H2)), const_spec((1, H2)),  # layer 1
                const_spec((H2, H2)),    const_spec((1, H2)),  # layer 2
                const_spec((H2, H2)),    const_spec((1, H2)),  # layer 3
                const_spec((H2, H2)),    const_spec((1, H2)),  # layer 4
            ],
            out_specs=pl.BlockSpec((tp, H2), lambda i: (i, 0)),
        ),
        compiler_params=pltpu.CompilerParams(
            dimension_semantics=("parallel",),     # megacore-shardable on v7x
            vmem_limit_bytes=vmem_limit_bytes),
    )(xp, w1b, b1b, w2b, b2b, w3b, b3b, w4b, b4b)

    # (N_pad/2, 2H) row-major is bit-identical to (N_pad, H); slice padding off.
    out = out_pairs.reshape(N_pad, H)[:N]
    return out.reshape(B, S, H)


def init_params(key, n_inputs, n_hidden_units, n_enc_layers=4):
    """PyTorch nn.Linear-style init: uniform(+/- 1/sqrt(fan_in)) for w and b."""
    params = []
    fan_ins = [n_inputs] + [n_hidden_units] * (n_enc_layers - 1)
    for fan_in in fan_ins:
        key, kw, kb = jax.random.split(key, 3)
        bound = 1.0 / (fan_in ** 0.5)
        w = jax.random.uniform(kw, (fan_in, n_hidden_units),
                               minval=-bound, maxval=bound, dtype=jnp.float32)
        b = jax.random.uniform(kb, (1, n_hidden_units),
                               minval=-bound, maxval=bound, dtype=jnp.float32)
        params.append((w, b))
    return params


def reference_forward(x, params):
    """Pure-JAX reference of the enc MLP (for correctness checks)."""
    h = jnp.squeeze(x, axis=1)
    (w1, b1), (w2, b2), (w3, b3), (w4, b4) = params
    h = jnp.maximum(h @ w1 + b1[0], 0.0)
    h = jnp.maximum(h @ w2 + b2[0], 0.0)
    h = jnp.maximum(h @ w3 + b3[0], 0.0)
    return h @ w4 + b4[0]


if __name__ == "__main__":
    # Module defaults: n_inputs=2, n_hidden_units=64.
    F, H = 2, 64
    key = jax.random.PRNGKey(0)
    kx1, kx2, kp = jax.random.split(key, 3)
    params = init_params(kp, n_inputs=F, n_hidden_units=H, n_enc_layers=4)

    # Case 1: canonical small shape (B, 1, S, F).
    B, S = 2, 8
    x = jax.random.normal(kx1, (B, 1, S, F), dtype=jnp.float32)
    out = jax.block_until_ready(basic_deepset_forward(x, params))
    ref = reference_forward(x, params)
    assert out.shape == (B, S, H)
    assert jnp.allclose(out, ref, atol=1e-5, rtol=1e-5), "case 1 mismatch"

    # Case 2: ragged row count (B*S not a multiple of the tile) + multi-step grid.
    B2, S2 = 3, 50
    x2 = jax.random.normal(kx2, (B2, 1, S2, F), dtype=jnp.float32)
    out2 = jax.block_until_ready(basic_deepset_forward(x2, params, tm=64))
    ref2 = reference_forward(x2, params)
    assert out2.shape == (B2, S2, H)
    assert jnp.allclose(out2, ref2, atol=1e-5, rtol=1e-5), "case 2 mismatch"

    # TODO(synk): the 4-D channels>1 branch of the PyTorch forward returns an
    # undefined `out` (dead/broken code in the original), so it is not implemented.
    print("KERNEL_OK")
</pallas_src>

<mosaic_0001>
module attributes {stable_mosaic.version = 11 : i64} {
  func.func @_enc_mlp_pair_kernel(%arg0: i32, %arg1: memref<8x4xf32, #tpu.memory_space<vmem>>, %arg2: memref<4x128xf32, #tpu.memory_space<vmem>>, %arg3: memref<1x128xf32, #tpu.memory_space<vmem>>, %arg4: memref<128x128xf32, #tpu.memory_space<vmem>>, %arg5: memref<1x128xf32, #tpu.memory_space<vmem>>, %arg6: memref<128x128xf32, #tpu.memory_space<vmem>>, %arg7: memref<1x128xf32, #tpu.memory_space<vmem>>, %arg8: memref<128x128xf32, #tpu.memory_space<vmem>>, %arg9: memref<1x128xf32, #tpu.memory_space<vmem>>, %arg10: memref<8x128xf32, #tpu.memory_space<vmem>>) attributes {dimension_semantics = [#tpu.dimension_semantics<parallel>], iteration_bounds = array<i64: 1>, scalar_prefetch = 0 : i64, scratch_operands = 0 : i64, tpu.core_type = #tpu.core_type<tc>, window_params = [{transform_indices = @transform_0, window_bounds = array<i64: 8, 4>}, {pipeline_mode = #tpu.pipeline_mode<synchronous>, transform_indices = @transform_1, window_bounds = array<i64: 4, 128>}, {pipeline_mode = #tpu.pipeline_mode<synchronous>, transform_indices = @transform_2, window_bounds = array<i64: 1, 128>}, {pipeline_mode = #tpu.pipeline_mode<synchronous>, transform_indices = @transform_3, window_bounds = array<i64: 128, 128>}, {pipeline_mode = #tpu.pipeline_mode<synchronous>, transform_indices = @transform_4, window_bounds = array<i64: 1, 128>}, {pipeline_mode = #tpu.pipeline_mode<synchronous>, transform_indices = @transform_5, window_bounds = array<i64: 128, 128>}, {pipeline_mode = #tpu.pipeline_mode<synchronous>, transform_indices = @transform_6, window_bounds = array<i64: 1, 128>}, {pipeline_mode = #tpu.pipeline_mode<synchronous>, transform_indices = @transform_7, window_bounds = array<i64: 128, 128>}, {pipeline_mode = #tpu.pipeline_mode<synchronous>, transform_indices = @transform_8, window_bounds = array<i64: 1, 128>}, {transform_indices = @transform_9, window_bounds = array<i64: 8, 128>}]} {
    %c0 = arith.constant 0 : index
    %c0_0 = arith.constant 0 : index
    %0 = vector.load %arg1[%c0, %c0_0] : memref<8x4xf32, #tpu.memory_space<vmem>>, vector<8x4xf32>
    %c0_1 = arith.constant 0 : index
    %c0_2 = arith.constant 0 : index
    %1 = vector.load %arg3[%c0_1, %c0_2] : memref<1x128xf32, #tpu.memory_space<vmem>>, vector<1x128xf32>
    %2 = vector.extract_strided_slice %0 {offsets = [0, 0], sizes = [8, 1], strides = [1, 1]} : vector<8x4xf32> to vector<8x1xf32>
    %c0_3 = arith.constant 0 : index
    %c0_4 = arith.constant 0 : index
    %3 = vector.load %arg2[%c0_3, %c0_4] : memref<4x128xf32, #tpu.memory_space<vmem>>, vector<1x128xf32>
    %4 = vector.broadcast %2 : vector<8x1xf32> to vector<8x128xf32>
    %5 = vector.broadcast %3 : vector<1x128xf32> to vector<8x128xf32>
    %6 = arith.mulf %4, %5 : vector<8x128xf32>
    %7 = vector.broadcast %1 : vector<1x128xf32> to vector<8x128xf32>
    %8 = arith.addf %7, %6 : vector<8x128xf32>
    %9 = vector.extract_strided_slice %0 {offsets = [0, 1], sizes = [8, 1], strides = [1, 1]} : vector<8x4xf32> to vector<8x1xf32>
    %c1 = arith.constant 1 : index
    %c0_5 = arith.constant 0 : index
    %10 = vector.load %arg2[%c1, %c0_5] : memref<4x128xf32, #tpu.memory_space<vmem>>, vector<1x128xf32>
    %11 = vector.broadcast %9 : vector<8x1xf32> to vector<8x128xf32>
    %12 = vector.broadcast %10 : vector<1x128xf32> to vector<8x128xf32>
    %13 = arith.mulf %11, %12 : vector<8x128xf32>
    %14 = arith.addf %8, %13 : vector<8x128xf32>
    %15 = vector.extract_strided_slice %0 {offsets = [0, 2], sizes = [8, 1], strides = [1, 1]} : vector<8x4xf32> to vector<8x1xf32>
    %c2 = arith.constant 2 : index
    %c0_6 = arith.constant 0 : index
    %16 = vector.load %arg2[%c2, %c0_6] : memref<4x128xf32, #tpu.memory_space<vmem>>, vector<1x128xf32>
    %17 = vector.broadcast %15 : vector<8x1xf32> to vector<8x128xf32>
    %18 = vector.broadcast %16 : vector<1x128xf32> to vector<8x128xf32>
    %19 = arith.mulf %17, %18 : vector<8x128xf32>
    %20 = arith.addf %14, %19 : vector<8x128xf32>
    %21 = vector.extract_strided_slice %0 {offsets = [0, 3], sizes = [8, 1], strides = [1, 1]} : vector<8x4xf32> to vector<8x1xf32>
    %c3 = arith.constant 3 : index
    %c0_7 = arith.constant 0 : index
    %22 = vector.load %arg2[%c3, %c0_7] : memref<4x128xf32, #tpu.memory_space<vmem>>, vector<1x128xf32>
    %23 = vector.broadcast %21 : vector<8x1xf32> to vector<8x128xf32>
    %24 = vector.broadcast %22 : vector<1x128xf32> to vector<8x128xf32>
    %25 = arith.mulf %23, %24 : vector<8x128xf32>
    %26 = arith.addf %20, %25 : vector<8x128xf32>
    %cst = arith.constant 0.000000e+00 : f32
    %27 = vector.broadcast %cst : f32 to vector<8x128xf32>
    %28 = arith.maximumf %26, %27 : vector<8x128xf32>
    %c0_8 = arith.constant 0 : index
    %c0_9 = arith.constant 0 : index
    %29 = vector.load %arg4[%c0_8, %c0_9] : memref<128x128xf32, #tpu.memory_space<vmem>>, vector<128x128xf32>
    %cst_10 = arith.constant dense<0.000000e+00> : vector<8x128xf32>
    %30 = tpu.matmul %28, %29, %cst_10 {dimension_numbers = #tpu.dot_dimension_numbers<[1], [0], [0], [1], [0, 0, 1, 1], [], []>} : vector<8x128xf32>, vector<128x128xf32>, vector<8x128xf32> -> vector<8x128xf32>
    %c0_11 = arith.constant 0 : index
    %c0_12 = arith.constant 0 : index
    %31 = vector.load %arg5[%c0_11, %c0_12] : memref<1x128xf32, #tpu.memory_space<vmem>>, vector<1x128xf32>
    %32 = vector.broadcast %31 : vector<1x128xf32> to vector<8x128xf32>
    %33 = arith.addf %30, %32 : vector<8x128xf32>
    %cst_13 = arith.constant 0.000000e+00 : f32
    %34 = vector.broadcast %cst_13 : f32 to vector<8x128xf32>
    %35 = arith.maximumf %33, %34 : vector<8x128xf32>
    %c0_14 = arith.constant 0 : index
    %c0_15 = arith.constant 0 : index
    %36 = vector.load %arg6[%c0_14, %c0_15] : memref<128x128xf32, #tpu.memory_space<vmem>>, vector<128x128xf32>
    %cst_16 = arith.constant dense<0.000000e+00> : vector<8x128xf32>
    %37 = tpu.matmul %35, %36, %cst_16 {dimension_numbers = #tpu.dot_dimension_numbers<[1], [0], [0], [1], [0, 0, 1, 1], [], []>} : vector<8x128xf32>, vector<128x128xf32>, vector<8x128xf32> -> vector<8x128xf32>
    %c0_17 = arith.constant 0 : index
    %c0_18 = arith.constant 0 : index
    %38 = vector.load %arg7[%c0_17, %c0_18] : memref<1x128xf32, #tpu.memory_space<vmem>>, vector<1x128xf32>
    %39 = vector.broadcast %38 : vector<1x128xf32> to vector<8x128xf32>
    %40 = arith.addf %37, %39 : vector<8x128xf32>
    %cst_19 = arith.constant 0.000000e+00 : f32
    %41 = vector.broadcast %cst_19 : f32 to vector<8x128xf32>
    %42 = arith.maximumf %40, %41 : vector<8x128xf32>
    %c0_20 = arith.constant 0 : index
    %c0_21 = arith.constant 0 : index
    %43 = vector.load %arg8[%c0_20, %c0_21] : memref<128x128xf32, #tpu.memory_space<vmem>>, vector<128x128xf32>
    %cst_22 = arith.constant dense<0.000000e+00> : vector<8x128xf32>
    %44 = tpu.matmul %42, %43, %cst_22 {dimension_numbers = #tpu.dot_dimension_numbers<[1], [0], [0], [1], [0, 0, 1, 1], [], []>} : vector<8x128xf32>, vector<128x128xf32>, vector<8x128xf32> -> vector<8x128xf32>
    %c0_23 = arith.constant 0 : index
    %c0_24 = arith.constant 0 : index
    %45 = vector.load %arg9[%c0_23, %c0_24] : memref<1x128xf32, #tpu.memory_space<vmem>>, vector<1x128xf32>
    %46 = vector.broadcast %45 : vector<1x128xf32> to vector<8x128xf32>
    %47 = arith.addf %44, %46 : vector<8x128xf32>
    %c0_25 = arith.constant 0 : index
    %c0_26 = arith.constant 0 : index
    %48 = vector.load %arg10[%c0_25, %c0_26] : memref<8x128xf32, #tpu.memory_space<vmem>>, vector<8x128xf32>
    tpu.vector_store %arg10[%c0_25, %c0_26], %47 {strides = array<i32>} : memref<8x128xf32, #tpu.memory_space<vmem>>, vector<8x128xf32>,
    return
  }
  func.func @transform_0(%arg0: i32) -> (i32, i32) {
    %c0_i32 = arith.constant 0 : i32
    %c0_i32_0 = arith.constant 0 : i32
    return %arg0, %c0_i32 : i32, i32
  }
  func.func @transform_1(%arg0: i32) -> (i32, i32) {
    %c0_i32 = arith.constant 0 : i32
    %c0_i32_0 = arith.constant 0 : i32
    %c0_i32_1 = arith.constant 0 : i32
    return %c0_i32, %c0_i32_0 : i32, i32
  }
  func.func @transform_2(%arg0: i32) -> (i32, i32) {
    %c0_i32 = arith.constant 0 : i32
    %c0_i32_0 = arith.constant 0 : i32
    %c0_i32_1 = arith.constant 0 : i32
    return %c0_i32, %c0_i32_0 : i32, i32
  }
  func.func @transform_3(%arg0: i32) -> (i32, i32) {
    %c0_i32 = arith.constant 0 : i32
    %c0_i32_0 = arith.constant 0 : i32
    %c0_i32_1 = arith.constant 0 : i32
    return %c0_i32, %c0_i32_0 : i32, i32
  }
  func.func @transform_4(%arg0: i32) -> (i32, i32) {
    %c0_i32 = arith.constant 0 : i32
    %c0_i32_0 = arith.constant 0 : i32
    %c0_i32_1 = arith.constant 0 : i32
    return %c0_i32, %c0_i32_0 : i32, i32
  }
  func.func @transform_5(%arg0: i32) -> (i32, i32) {
    %c0_i32 = arith.constant 0 : i32
    %c0_i32_0 = arith.constant 0 : i32
    %c0_i32_1 = arith.constant 0 : i32
    return %c0_i32, %c0_i32_0 : i32, i32
  }
  func.func @transform_6(%arg0: i32) -> (i32, i32) {
    %c0_i32 = arith.constant 0 : i32
    %c0_i32_0 = arith.constant 0 : i32
    %c0_i32_1 = arith.constant 0 : i32
    return %c0_i32, %c0_i32_0 : i32, i32
  }
  func.func @transform_7(%arg0: i32) -> (i32, i32) {
    %c0_i32 = arith.constant 0 : i32
    %c0_i32_0 = arith.constant 0 : i32
    %c0_i32_1 = arith.constant 0 : i32
    return %c0_i32, %c0_i32_0 : i32, i32
  }
  func.func @transform_8(%arg0: i32) -> (i32, i32) {
    %c0_i32 = arith.constant 0 : i32
    %c0_i32_0 = arith.constant 0 : i32
    %c0_i32_1 = arith.constant 0 : i32
    return %c0_i32, %c0_i32_0 : i32, i32
  }
  func.func @transform_9(%arg0: i32) -> (i32, i32) {
    %c0_i32 = arith.constant 0 : i32
    %c0_i32_0 = arith.constant 0 : i32
    return %arg0, %c0_i32 : i32, i32
  }
}

</mosaic_0001>

<llo_original>
// kernel: tpu_custom_call.1
$region0: #{tpu_custom_call.1}
  #allocation0 [shape = 'u32[]', space=smem, size = 0x4, offset = 0x4, fixed_abs, tag = 'smem constant byte address 0x4 - core index']
  #allocation1 [shape = 'u32[144,128]{1,0:T(1,128)}', space=vmem, size = 0x12000, scoped, tag = 'internal scratch']
  %s0 = inlined_call_operand.vmem [shape: f32[8,4], index: 0, kind: input, shape index: {}]
  %s1 = inlined_call_operand.vmem [shape: f32[4,128], index: 1, kind: input, shape index: {}]
  %s2 = inlined_call_operand.vmem [shape: f32[1,128], index: 2, kind: input, shape index: {}]
  %s3 = inlined_call_operand.hbm [shape: f32[128,128], index: 3, kind: input, shape index: {}]
  %s4 = inlined_call_operand.vmem [shape: f32[1,128], index: 4, kind: input, shape index: {}]
  %s5 = inlined_call_operand.hbm [shape: f32[128,128], index: 5, kind: input, shape index: {}]
  %s6 = inlined_call_operand.vmem [shape: f32[1,128], index: 6, kind: input, shape index: {}]
  %s7 = inlined_call_operand.hbm [shape: f32[128,128], index: 7, kind: input, shape index: {}]
  %s8 = inlined_call_operand.vmem [shape: f32[1,128], index: 8, kind: input, shape index: {}]
  %s9 = inlined_call_operand.hbm [shape: f32[8,128], index: 9, kind: output, shape index: {}]
  %s10 = sld [smem:[#allocation0]]
  $region58: #{tpu_custom_call.1} parent=0
    _
  %s12 = ssub.s32 1, %s10
  %s13 = scalar_select 0, %s12, %s10
  $region1: #{tpu_custom_call.1} parent=0
    #allocation2 [shape = 'u8[65536]{0}', space=vmem, size = 0x10000, scoped, tag = 'input window, operand 3, single buffered']
    #allocation3 [shape = 's32[1]{0}', space=sflag, size = 0x4, scoped, tag = 'scoped memory for tpu_custom_call.1']
    #allocation4 [shape = 's32[1]{0}', space=sflag, size = 0x4, scoped, tag = 'scoped memory for tpu_custom_call.1']
    #allocation5 [shape = 'u8[65536]{0}', space=vmem, size = 0x10000, scoped, tag = 'input window, operand 5, single buffered']
    #allocation6 [shape = 's32[1]{0}', space=sflag, size = 0x4, scoped, tag = 'scoped memory for tpu_custom_call.1']
    #allocation7 [shape = 'u8[65536]{0}', space=vmem, size = 0x10000, scoped, tag = 'input window, operand 7, single buffered']
    #allocation8 [shape = 'u8[4096]{0}', space=vmem, size = 0x1000, scoped, tag = 'output window, operand 0, single buffered']
    %14 = vsyncpa [#allocation3], 0
    %15 = vsyncpa [#allocation6], 0
    %16 = vsyncpa [#allocation4], 0
    // Predicated region
    $region2: #{tpu_custom_call.1} parent=1 // pred_check
      _
    $region3: #{tpu_custom_call.1} parent=1 // pred_check_branch
      %18 = sbr.rel (0) target = $region5
    $region4: #{tpu_custom_call.1} parent=1 // pred_region
      _
    $region5: #{tpu_custom_call.1} parent=1 // pred_fallthru
      _
    // Predicated region
    $region6: #{tpu_custom_call.1} parent=1 // pred_check
      _
    $region7: #{tpu_custom_call.1} parent=1 // pred_check_branch
      %20 = sbr.rel (0) target = $region9
    $region8: #{tpu_custom_call.1} parent=1 // pred_region
      _
    $region9: #{tpu_custom_call.1} parent=1 // pred_fallthru
      _
    // Predicated region
    $region10: #{tpu_custom_call.1} parent=1 // pred_check
      _
    $region11: #{tpu_custom_call.1} parent=1 // pred_check_branch
      %22 = sbr.rel (0) target = $region13
    $region12: #{tpu_custom_call.1} parent=1 // pred_region
      _
    $region13: #{tpu_custom_call.1} parent=1 // pred_fallthru
      _
    // Predicated region
    $region14: #{tpu_custom_call.1} parent=1 // pred_check
      _
    $region15: #{tpu_custom_call.1} parent=1 // pred_check_branch
      %24 = sbr.rel (0) target = $region17
    $region16: #{tpu_custom_call.1} parent=1 // pred_region
      %s26 = ssub.s32 2048, 2048
      %27 = vsyncadd [#allocation3], %s26
      %s28 = sshll.u32 [#allocation2], 4
      %s29 = int_to_ptr.vmem [resolvable:$true] %s28
      %34 = dma.hbm_to_vmem [thread:$0]  %s3, 2048, %s29, [#allocation3], 128, 128, 8
    $region17: #{tpu_custom_call.1} parent=1 // pred_fallthru
      _
    // Predicated region
    $region18: #{tpu_custom_call.1} parent=1 // pred_check
      _
    $region19: #{tpu_custom_call.1} parent=1 // pred_check_branch
      %36 = sbr.rel (0) target = $region21
    $region20: #{tpu_custom_call.1} parent=1 // pred_region
      _
    $region21: #{tpu_custom_call.1} parent=1 // pred_fallthru
      _
    // Predicated region
    $region22: #{tpu_custom_call.1} parent=1 // pred_check
      _
    $region23: #{tpu_custom_call.1} parent=1 // pred_check_branch
      %38 = sbr.rel (0) target = $region25
    $region24: #{tpu_custom_call.1} parent=1 // pred_region
      %s40 = ssub.s32 2048, 2048
      %41 = vsyncadd [#allocation6], %s40
      %s42 = sshll.u32 [#allocation5], 4
      %s43 = int_to_ptr.vmem [resolvable:$true] %s42
      %48 = dma.hbm_to_vmem [thread:$0]  %s5, 2048, %s43, [#allocation6], 128, 128, 8
    $region25: #{tpu_custom_call.1} parent=1 // pred_fallthru
      _
    // Predicated region
    $region26: #{tpu_custom_call.1} parent=1 // pred_check
      _
    $region27: #{tpu_custom_call.1} parent=1 // pred_check_branch
      %50 = sbr.rel (0) target = $region29
    $region28: #{tpu_custom_call.1} parent=1 // pred_region
      _
    $region29: #{tpu_custom_call.1} parent=1 // pred_fallthru
      _
    // Predicated region
    $region30: #{tpu_custom_call.1} parent=1 // pred_check
      _
    $region31: #{tpu_custom_call.1} parent=1 // pred_check_branch
      %52 = sbr.rel (0) target = $region33
    $region32: #{tpu_custom_call.1} parent=1 // pred_region
      %s54 = ssub.s32 2048, 2048
      %55 = vsyncadd [#allocation6], %s54
      %s56 = sshll.u32 [#allocation7], 4
      %s57 = int_to_ptr.vmem [resolvable:$true] %s56
      %62 = dma.hbm_to_vmem [thread:$0]  %s7, 2048, %s57, [#allocation6], 128, 128, 8
    $region33: #{tpu_custom_call.1} parent=1 // pred_fallthru
      _
    // Predicated region
    $region34: #{tpu_custom_call.1} parent=1 // pred_check
      _
    $region35: #{tpu_custom_call.1} parent=1 // pred_check_branch
      %64 = sbr.rel (0) target = $region37
    $region36: #{tpu_custom_call.1} parent=1 // pred_region
      _
    $region37: #{tpu_custom_call.1} parent=1 // pred_fallthru
      _
    // Predicated region
    $region38: #{tpu_custom_call.1} parent=1 // pred_check
      _
    $region39: #{tpu_custom_call.1} parent=1 // pred_check_branch
      %66 = sbr.rel (0) target = $region41
    $region40: #{tpu_custom_call.1} parent=1 // pred_region
      %67 = dma.done [#allocation3], 2048
    $region41: #{tpu_custom_call.1} parent=1 // pred_fallthru
      _
    // Predicated region
    $region42: #{tpu_custom_call.1} parent=1 // pred_check
      _
    $region43: #{tpu_custom_call.1} parent=1 // pred_check_branch
      %69 = sbr.rel (0) target = $region45
    $region44: #{tpu_custom_call.1} parent=1 // pred_region
      %70 = dma.done [#allocation6], 2048
    $region45: #{tpu_custom_call.1} parent=1 // pred_fallthru
      _
    // Predicated region
    $region46: #{tpu_custom_call.1} parent=1 // pred_check
      _
    $region47: #{tpu_custom_call.1} parent=1 // pred_check_branch
      %72 = sbr.rel (0) target = $region49
    $region48: #{tpu_custom_call.1} parent=1 // pred_region
      %73 = dma.done [#allocation6], 2048
    $region49: #{tpu_custom_call.1} parent=1 // pred_fallthru
      _
    %v74 = vld [vmem:[%s0] sm:$0xff]
    %v75 = vld [vmem:[%s2] sm:$0x1]
    %v76 = vld [vmem:[%s1] sm:$0x1]
    %78 = vset.pattern.permute.xlu0 0
    %79 = vperm.xlu0 %78, %v74
    %v80 = vpop.permute.xlu0 %79
    %v82 = vlaneseq
    %v83 = vshrl.u32 %v82, 7
    %v84 = vsub.s32 0, %v83
    %v85 = vrot.slane %v76, %v84
    %v86 = vmul.f32 %v80, %v85
    %v88 = vlaneseq
    %v89 = vshrl.u32 %v88, 7
    %v90 = vsub.s32 0, %v89
    %v91 = vrot.slane %v75, %v90
    %v93 = vadd.f32 %v91, %v86
    %v94 = vld [vmem:[%s1 + $0x1] sm:$0x1]
    %95 = vset.pattern.permute.xlu0 1
    %96 = vperm.xlu0 %95, %v74
    %v97 = vpop.permute.xlu0 %96
    %v99 = vlaneseq
    %v100 = vshrl.u32 %v99, 7
    %v101 = vsub.s32 0, %v100
    %v102 = vrot.slane %v94, %v101
    %v103 = vmul.f32 %v97, %v102
    %v104 = vadd.f32 %v93, %v103
    %v105 = vld [vmem:[%s1 + $0x2] sm:$0x1]
    %106 = vset.pattern.permute.xlu0 2
    %107 = vperm.xlu0 %106, %v74
    %v108 = vpop.permute.xlu0 %107
    %v110 = vlaneseq
    %v111 = vshrl.u32 %v110, 7
    %v112 = vsub.s32 0, %v111
    %v113 = vrot.slane %v105, %v112
    %v114 = vmul.f32 %v108, %v113
    %v115 = vadd.f32 %v104, %v114
    %v116 = vld [vmem:[%s1 + $0x3] sm:$0x1]
    %117 = vset.pattern.permute.xlu0 3
    %118 = vperm.xlu0 %117, %v74
    %v119 = vpop.permute.xlu0 %118
    %v121 = vlaneseq
    %v122 = vshrl.u32 %v121, 7
    %v123 = vsub.s32 0, %v122
    %v124 = vrot.slane %v116, %v123
    %v125 = vmul.f32 %v119, %v124
    %v126 = vadd.f32 %v115, %v125
    %v127 = vmax.f32 %v126, 0.0
    %v128 = vld [vmem:[#allocation2] sm:$0xff]
    %v129 = vld [vmem:[#allocation2 + $0x8] sm:$0xff]
    %v130 = vld [vmem:[#allocation2 + $0x10] sm:$0xff]
    %v131 = vld [vmem:[#allocation2 + $0x18] sm:$0xff]
    %v132 = vld [vmem:[#allocation2 + $0x20] sm:$0xff]
    %v133 = vld [vmem:[#allocation2 + $0x28] sm:$0xff]
    %v134 = vld [vmem:[#allocation2 + $0x30] sm:$0xff]
    %v135 = vld [vmem:[#allocation2 + $0x38] sm:$0xff]
    %v136 = vld [vmem:[#allocation2 + $0x40] sm:$0xff]
    %v137 = vld [vmem:[#allocation2 + $0x48] sm:$0xff]
    %v138 = vld [vmem:[#allocation2 + $0x50] sm:$0xff]
    %v139 = vld [vmem:[#allocation2 + $0x58] sm:$0xff]
    %v140 = vld [vmem:[#allocation2 + $0x60] sm:$0xff]
    %v141 = vld [vmem:[#allocation2 + $0x68] sm:$0xff]
    %v142 = vld [vmem:[#allocation2 + $0x70] sm:$0xff]
    %v143 = vld [vmem:[#allocation2 + $0x78] sm:$0xff]
    %v144 = vld [vmem:[%s4] sm:$0x1]
    %v146 = vlaneseq
    %v147 = vshrl.u32 %v146, 7
    %v148 = vsub.s32 0, %v147
    %v149 = vrot.slane %v144, %v148
    %151 = vmatprep.subr.mxu0 0.0
    %152 = vmatpush1.msra.mxu0 %v128
    %153 = vmatprep.subr.mxu0 0.0
    %154 = vmatpush1.msra.mxu0 %v129
    %155 = vmatprep.subr.mxu0 0.0
    %156 = vmatpush1.msra.mxu0 %v130
    %157 = vmatprep.subr.mxu0 0.0
    %158 = vmatpush1.msra.mxu0 %v131
    %159 = vmatprep.subr.mxu0 0.0
    %160 = vmatpush1.msra.mxu0 %v132
    %161 = vmatprep.subr.mxu0 0.0
    %162 = vmatpush1.msra.mxu0 %v133
    %163 = vmatprep.subr.mxu0 0.0
    %164 = vmatpush1.msra.mxu0 %v134
    %165 = vmatprep.subr.mxu0 0.0
    %166 = vmatpush1.msra.mxu0 %v135
    %167 = vmatprep.subr.mxu0 0.0
    %168 = vmatpush1.msra.mxu0 %v136
    %169 = vmatprep.subr.mxu0 0.0
    %170 = vmatpush1.msra.mxu0 %v137
    %171 = vmatprep.subr.mxu0 0.0
    %172 = vmatpush1.msra.mxu0 %v138
    %173 = vmatprep.subr.mxu0 0.0
    %174 = vmatpush1.msra.mxu0 %v139
    %175 = vmatprep.subr.mxu0 0.0
    %176 = vmatpush1.msra.mxu0 %v140
    %177 = vmatprep.subr.mxu0 0.0
    %178 = vmatpush1.msra.mxu0 %v141
    %179 = vmatprep.subr.mxu0 0.0
    %180 = vmatpush1.msra.mxu0 %v142
    %181 = vmatprep.subr.mxu0 0.0
    %182 = vmatpush1.msra.mxu0 %v143
    %183 = vmatprep.subr.mxu0 0.0
    %184 = vmatpush1.msra.mxu0 0.0
    %185 = vmatprep.subr.mxu0 0.0
    %186 = vmatpush1.msra.mxu0 0.0
    %187 = vmatprep.subr.mxu0 0.0
    %188 = vmatpush1.msra.mxu0 0.0
    %189 = vmatprep.subr.mxu0 0.0
    %190 = vmatpush1.msra.mxu0 0.0
    %191 = vmatprep.subr.mxu0 0.0
    %192 = vmatpush1.msra.mxu0 0.0
    %193 = vmatprep.subr.mxu0 0.0
    %194 = vmatpush1.msra.mxu0 0.0
    %195 = vmatprep.subr.mxu0 0.0
    %196 = vmatpush1.msra.mxu0 0.0
    %197 = vmatprep.subr.mxu0 0.0
    %198 = vmatpush1.msra.mxu0 0.0
    %199 = vmatprep.subr.mxu0 0.0
    %200 = vmatpush1.msra.mxu0 0.0
    %201 = vmatprep.subr.mxu0 0.0
    %202 = vmatpush1.msra.mxu0 0.0
    %203 = vmatprep.subr.mxu0 0.0
    %204 = vmatpush1.msra.mxu0 0.0
    %205 = vmatprep.subr.mxu0 0.0
    %206 = vmatpush1.msra.mxu0 0.0
    %207 = vmatprep.subr.mxu0 0.0
    %208 = vmatpush1.msra.mxu0 0.0
    %209 = vmatprep.subr.mxu0 0.0
    %210 = vmatpush1.msra.mxu0 0.0
    %211 = vmatprep.subr.mxu0 0.0
    %212 = vmatpush1.msra.mxu0 0.0
    %213 = vmatprep.subr.mxu0 0.0
    %214 = vmatpush1.msra.mxu0 0.0
    %215 = vmatprep.mubr.f32.mxu0 0.0
    %216 = vmatmul.mubr.f32.gmra.mrb[0].mxu0 %v127
    %v217 = vpop.f32.mrb[0].mxu0
    %v218 = vadd.f32 %v149, %v217
    %v219 = vpop.f32.mrb[0].mxu0
    %220 = vdwg.mxu0
    %v221 = vmax.f32 %v218, 0.0
    %v222 = vld [vmem:[#allocation5] sm:$0xff]
    %v223 = vld [vmem:[#allocation5 + $0x8] sm:$0xff]
    %v224 = vld [vmem:[#allocation5 + $0x10] sm:$0xff]
    %v225 = vld [vmem:[#allocation5 + $0x18] sm:$0xff]
    %v226 = vld [vmem:[#allocation5 + $0x20] sm:$0xff]
    %v227 = vld [vmem:[#allocation5 + $0x28] sm:$0xff]
    %v228 = vld [vmem:[#allocation5 + $0x30] sm:$0xff]
    %v229 = vld [vmem:[#allocation5 + $0x38] sm:$0xff]
    %v230 = vld [vmem:[#allocation5 + $0x40] sm:$0xff]
    %v231 = vld [vmem:[#allocation5 + $0x48] sm:$0xff]
    %v232 = vld [vmem:[#allocation5 + $0x50] sm:$0xff]
    %v233 = vld [vmem:[#allocation5 + $0x58] sm:$0xff]
    %v234 = vld [vmem:[#allocation5 + $0x60] sm:$0xff]
    %v235 = vld [vmem:[#allocation5 + $0x68] sm:$0xff]
    %v236 = vld [vmem:[#allocation5 + $0x70] sm:$0xff]
    %v237 = vld [vmem:[#allocation5 + $0x78] sm:$0xff]
    %v238 = vld [vmem:[%s6] sm:$0x1]
    %v240 = vlaneseq
    %v241 = vshrl.u32 %v240, 7
    %v242 = vsub.s32 0, %v241
    %v243 = vrot.slane %v238, %v242
    %245 = vmatprep.subr.mxu0 0.0
    %246 = vmatpush1.msra.mxu0 %v222
    %247 = vmatprep.subr.mxu0 0.0
    %248 = vmatpush1.msra.mxu0 %v223
    %249 = vmatprep.subr.mxu0 0.0
    %250 = vmatpush1.msra.mxu0 %v224
    %251 = vmatprep.subr.mxu0 0.0
    %252 = vmatpush1.msra.mxu0 %v225
    %253 = vmatprep.subr.mxu0 0.0
    %254 = vmatpush1.msra.mxu0 %v226
    %255 = vmatprep.subr.mxu0 0.0
    %256 = vmatpush1.msra.mxu0 %v227
    %257 = vmatprep.subr.mxu0 0.0
    %258 = vmatpush1.msra.mxu0 %v228
    %259 = vmatprep.subr.mxu0 0.0
    %260 = vmatpush1.msra.mxu0 %v229
    %261 = vmatprep.subr.mxu0 0.0
    %262 = vmatpush1.msra.mxu0 %v230
    %263 = vmatprep.subr.mxu0 0.0
    %264 = vmatpush1.msra.mxu0 %v231
    %265 = vmatprep.subr.mxu0 0.0
    %266 = vmatpush1.msra.mxu0 %v232
    %267 = vmatprep.subr.mxu0 0.0
    %268 = vmatpush1.msra.mxu0 %v233
    %269 = vmatprep.subr.mxu0 0.0
    %270 = vmatpush1.msra.mxu0 %v234
    %271 = vmatprep.subr.mxu0 0.0
    %272 = vmatpush1.msra.mxu0 %v235
    %273 = vmatprep.subr.mxu0 0.0
    %274 = vmatpush1.msra.mxu0 %v236
    %275 = vmatprep.subr.mxu0 0.0
    %276 = vmatpush1.msra.mxu0 %v237
    %277 = vmatprep.subr.mxu0 0.0
    %278 = vmatpush1.msra.mxu0 0.0
    %279 = vmatprep.subr.mxu0 0.0
    %280 = vmatpush1.msra.mxu0 0.0
    %281 = vmatprep.subr.mxu0 0.0
    %282 = vmatpush1.msra.mxu0 0.0
    %283 = vmatprep.subr.mxu0 0.0
    %284 = vmatpush1.msra.mxu0 0.0
    %285 = vmatprep.subr.mxu0 0.0
    %286 = vmatpush1.msra.mxu0 0.0
    %287 = vmatprep.subr.mxu0 0.0
    %288 = vmatpush1.msra.mxu0 0.0
    %289 = vmatprep.subr.mxu0 0.0
    %290 = vmatpush1.msra.mxu0 0.0
    %291 = vmatprep.subr.mxu0 0.0
    %292 = vmatpush1.msra.mxu0 0.0
    %293 = vmatprep.subr.mxu0 0.0
    %294 = vmatpush1.msra.mxu0 0.0
    %295 = vmatprep.subr.mxu0 0.0
    %296 = vmatpush1.msra.mxu0 0.0
    %297 = vmatprep.subr.mxu0 0.0
    %298 = vmatpush1.msra.mxu0 0.0
    %299 = vmatprep.subr.mxu0 0.0
    %300 = vmatpush1.msra.mxu0 0.0
    %301 = vmatprep.subr.mxu0 0.0
    %302 = vmatpush1.msra.mxu0 0.0
    %303 = vmatprep.subr.mxu0 0.0
    %304 = vmatpush1.msra.mxu0 0.0
    %305 = vmatprep.subr.mxu0 0.0
    %306 = vmatpush1.msra.mxu0 0.0
    %307 = vmatprep.subr.mxu0 0.0
    %308 = vmatpush1.msra.mxu0 0.0
    %309 = vmatprep.mubr.f32.mxu0 0.0
    %310 = vmatmul.mubr.f32.gmra.mrb[0].mxu0 %v221
    %v311 = vpop.f32.mrb[0].mxu0
    %v312 = vadd.f32 %v243, %v311
    %v313 = vpop.f32.mrb[0].mxu0
    %314 = vdwg.mxu0
    %v315 = vmax.f32 %v312, 0.0
    %v316 = vld [vmem:[#allocation7] sm:$0xff]
    %v317 = vld [vmem:[#allocation7 + $0x8] sm:$0xff]
    %v318 = vld [vmem:[#allocation7 + $0x10] sm:$0xff]
    %v319 = vld [vmem:[#allocation7 + $0x18] sm:$0xff]
    %v320 = vld [vmem:[#allocation7 + $0x20] sm:$0xff]
    %v321 = vld [vmem:[#allocation7 + $0x28] sm:$0xff]
    %v322 = vld [vmem:[#allocation7 + $0x30] sm:$0xff]
    %v323 = vld [vmem:[#allocation7 + $0x38] sm:$0xff]
    %v324 = vld [vmem:[#allocation7 + $0x40] sm:$0xff]
    %v325 = vld [vmem:[#allocation7 + $0x48] sm:$0xff]
    %v326 = vld [vmem:[#allocation7 + $0x50] sm:$0xff]
    %v327 = vld [vmem:[#allocation7 + $0x58] sm:$0xff]
    %v328 = vld [vmem:[#allocation7 + $0x60] sm:$0xff]
    %v329 = vld [vmem:[#allocation7 + $0x68] sm:$0xff]
    %v330 = vld [vmem:[#allocation7 + $0x70] sm:$0xff]
    %v331 = vld [vmem:[#allocation7 + $0x78] sm:$0xff]
    %v332 = vld [vmem:[%s8] sm:$0x1]
    %v334 = vlaneseq
    %v335 = vshrl.u32 %v334, 7
    %v336 = vsub.s32 0, %v335
    %v337 = vrot.slane %v332, %v336
    %339 = vmatprep.subr.mxu0 0.0
    %340 = vmatpush1.msra.mxu0 %v316
    %341 = vmatprep.subr.mxu0 0.0
    %342 = vmatpush1.msra.mxu0 %v317
    %343 = vmatprep.subr.mxu0 0.0
    %344 = vmatpush1.msra.mxu0 %v318
    %345 = vmatprep.subr.mxu0 0.0
    %346 = vmatpush1.msra.mxu0 %v319
    %347 = vmatprep.subr.mxu0 0.0
    %348 = vmatpush1.msra.mxu0 %v320
    %349 = vmatprep.subr.mxu0 0.0
    %350 = vmatpush1.msra.mxu0 %v321
    %351 = vmatprep.subr.mxu0 0.0
    %352 = vmatpush1.msra.mxu0 %v322
    %353 = vmatprep.subr.mxu0 0.0
    %354 = vmatpush1.msra.mxu0 %v323
    %355 = vmatprep.subr.mxu0 0.0
    %356 = vmatpush1.msra.mxu0 %v324
    %357 = vmatprep.subr.mxu0 0.0
    %358 = vmatpush1.msra.mxu0 %v325
    %359 = vmatprep.subr.mxu0 0.0
    %360 = vmatpush1.msra.mxu0 %v326
    %361 = vmatprep.subr.mxu0 0.0
    %362 = vmatpush1.msra.mxu0 %v327
    %363 = vmatprep.subr.mxu0 0.0
    %364 = vmatpush1.msra.mxu0 %v328
    %365 = vmatprep.subr.mxu0 0.0
    %366 = vmatpush1.msra.mxu0 %v329
    %367 = vmatprep.subr.mxu0 0.0
    %368 = vmatpush1.msra.mxu0 %v330
    %369 = vmatprep.subr.mxu0 0.0
    %370 = vmatpush1.msra.mxu0 %v331
    %371 = vmatprep.subr.mxu0 0.0
    %372 = vmatpush1.msra.mxu0 0.0
    %373 = vmatprep.subr.mxu0 0.0
    %374 = vmatpush1.msra.mxu0 0.0
    %375 = vmatprep.subr.mxu0 0.0
    %376 = vmatpush1.msra.mxu0 0.0
    %377 = vmatprep.subr.mxu0 0.0
    %378 = vmatpush1.msra.mxu0 0.0
    %379 = vmatprep.subr.mxu0 0.0
    %380 = vmatpush1.msra.mxu0 0.0
    %381 = vmatprep.subr.mxu0 0.0
    %382 = vmatpush1.msra.mxu0 0.0
    %383 = vmatprep.subr.mxu0 0.0
    %384 = vmatpush1.msra.mxu0 0.0
    %385 = vmatprep.subr.mxu0 0.0
    %386 = vmatpush1.msra.mxu0 0.0
    %387 = vmatprep.subr.mxu0 0.0
    %388 = vmatpush1.msra.mxu0 0.0
    %389 = vmatprep.subr.mxu0 0.0
    %390 = vmatpush1.msra.mxu0 0.0
    %391 = vmatprep.subr.mxu0 0.0
    %392 = vmatpush1.msra.mxu0 0.0
    %393 = vmatprep.subr.mxu0 0.0
    %394 = vmatpush1.msra.mxu0 0.0
    %395 = vmatprep.subr.mxu0 0.0
    %396 = vmatpush1.msra.mxu0 0.0
    %397 = vmatprep.subr.mxu0 0.0
    %398 = vmatpush1.msra.mxu0 0.0
    %399 = vmatprep.subr.mxu0 0.0
    %400 = vmatpush1.msra.mxu0 0.0
    %401 = vmatprep.subr.mxu0 0.0
    %402 = vmatpush1.msra.mxu0 0.0
    %403 = vmatprep.mubr.f32.mxu0 0.0
    %404 = vmatmul.mubr.f32.gmra.mrb[0].mxu0 %v315
    %v405 = vpop.f32.mrb[0].mxu0
    %v406 = vadd.f32 %v337, %v405
    %v407 = vpop.f32.mrb[0].mxu0
    %408 = vdwg.mxu0
    %409 = vst [vmem:[#allocation8] sm:$0xff] %v406
    // Predicated region
    $region50: #{tpu_custom_call.1} parent=1 // pred_check
      _
    $region51: #{tpu_custom_call.1} parent=1 // pred_check_branch
      %411 = sbr.rel (0) target = $region53
    $region52: #{tpu_custom_call.1} parent=1 // pred_region
      %s413 = ssub.s32 128, 128
      %414 = vsyncadd [#allocation4], %s413
      %s416 = sshll.u32 [#allocation8], 4
      %s417 = int_to_ptr.vmem [resolvable:$true] %s416
      %419 = dma.vmem_to_hbm [thread:$0]  %s417, 128, %s9, [#allocation4]
    $region53: #{tpu_custom_call.1} parent=1 // pred_fallthru
      _
    // Predicated region
    $region54: #{tpu_custom_call.1} parent=1 // pred_check
      _
    $region55: #{tpu_custom_call.1} parent=1 // pred_check_branch
      %421 = sbr.rel (0) target = $region57
    $region56: #{tpu_custom_call.1} parent=1 // pred_region
      %422 = dma.done [#allocation4], 128
    $region57: #{tpu_custom_call.1} parent=1 // pred_fallthru
      _
    %423 = vsyncpa [#allocation3], 1
    %424 = vsyncpa [#allocation6], 1
    %425 = vsyncpa [#allocation4], 1

</llo_original>
